<compile_context>
chip_gen: v7x
topology: tpu7x:2x2x1
jax: 0.10.0
libtpu: 0.0.40
codegen_flags: <defaults>
</compile_context>

<pallas_src>
import jax
import jax.numpy as jnp
from jax.experimental import pallas as pl
from jax.experimental.pallas import tpu as pltpu


def _uncertainty_loss_kernel(losses_ref, sigma_ref, out_ref):
    # losses_ref, sigma_ref: (1, N) in VMEM (N on the lane axis).
    # out_ref: (1, 1) f32 in SMEM (scalar egress — avoids a masked 1-lane vst).
    losses = losses_ref[...].astype(jnp.float32)      # (1, N)
    sigma = sigma_ref[...].astype(jnp.float32)        # (1, N)

    sig2 = sigma * sigma                               # sigma_i^2
    inv = pl.reciprocal(2.0 * sig2, approx=False)      # 1 / (2 * sigma_i^2), exact
    # Single fused reduction:
    #   sum_i [ loss_i / (2 sigma_i^2) + log(sigma_i^2) ]
    # == sum_i loss_i / (2 sigma_i^2) + log( prod_i sigma_i^2 )
    out_ref[0, 0] = jnp.sum(losses * inv + jnp.log(sig2))


def uncertainty_loss(losses: jax.Array, sigma: jax.Array) -> jax.Array:
    """losses: (num_losses,) per-task scalar losses; sigma: (num_losses,) parameter."""
    num_losses = losses.shape[0]
    assert sigma.shape == (num_losses,)

    # Metadata-only reshapes to (1, N): sublane=1, N on the lane axis.
    losses_2d = losses.reshape(1, num_losses)
    sigma_2d = sigma.reshape(1, num_losses)

    out = pl.pallas_call(
        _uncertainty_loss_kernel,
        out_shape=jax.ShapeDtypeStruct((1, 1), jnp.float32),
        in_specs=[
            # Full-array blocks (equal to array dims -> exempt from the (8,128) rule).
            pl.BlockSpec((1, num_losses), lambda: (0, 0)),
            pl.BlockSpec((1, num_losses), lambda: (0, 0)),
        ],
        out_specs=pl.BlockSpec(memory_space=pltpu.MemorySpace.SMEM),
    )(losses_2d, sigma_2d)
    return out[0, 0]


def uncertainty_loss_ref(losses: jax.Array, sigma: jax.Array) -> jax.Array:
    """Pure-JAX reference matching the PyTorch forward exactly."""
    sig2 = sigma.astype(jnp.float32) ** 2
    loss = jnp.sum(losses.astype(jnp.float32) / (2.0 * sig2))
    return loss + jnp.log(jnp.prod(sig2))


if __name__ == "__main__":
    num_losses = 4

    key = jax.random.PRNGKey(0)
    k_sigma, k_losses = jax.random.split(key)

    # Deterministic "parameter" init (mirrors torch.randn(num_losses) in __init__).
    sigma = jax.random.normal(k_sigma, (num_losses,), dtype=jnp.float32)
    # Per-task scalar losses (the *loss_fn varargs in forward).
    losses = jnp.abs(jax.random.normal(k_losses, (num_losses,), dtype=jnp.float32))

    out = uncertainty_loss(losses, sigma)
    out = jax.block_until_ready(out)

    ref = uncertainty_loss_ref(losses, sigma)
    assert jnp.allclose(out, ref, rtol=1e-5, atol=1e-5), (out, ref)

    print("KERNEL_OK")
</pallas_src>

<mosaic_0001>
module attributes {stable_mosaic.version = 11 : i64} {
  func.func @_uncertainty_loss_kernel(%arg0: memref<1x4xf32, #tpu.memory_space<vmem>>, %arg1: memref<1x4xf32, #tpu.memory_space<vmem>>, %arg2: memref<1x1xf32, #tpu.memory_space<smem>>) attributes {dimension_semantics = [], scalar_prefetch = 0 : i64, scratch_operands = 0 : i64, tpu.core_type = #tpu.core_type<tc>} {
    %c0 = arith.constant 0 : index
    %c0_0 = arith.constant 0 : index
    %0 = vector.load %arg0[%c0, %c0_0] : memref<1x4xf32, #tpu.memory_space<vmem>>, vector<1x4xf32>
    %c0_1 = arith.constant 0 : index
    %c0_2 = arith.constant 0 : index
    %1 = vector.load %arg1[%c0_1, %c0_2] : memref<1x4xf32, #tpu.memory_space<vmem>>, vector<1x4xf32>
    %2 = arith.mulf %1, %1 : vector<1x4xf32>
    %cst = arith.constant 2.000000e+00 : f32
    %3 = vector.broadcast %cst : f32 to vector<1x4xf32>
    %4 = arith.mulf %3, %2 : vector<1x4xf32>
    %5 = tpu.reciprocal %4 : vector<1x4xf32> -> vector<1x4xf32>
    %6 = arith.mulf %0, %5 : vector<1x4xf32>
    %7 = math.log %2 : vector<1x4xf32>
    %8 = arith.addf %6, %7 : vector<1x4xf32>
    %9 = vector.shape_cast %8 : vector<1x4xf32> to vector<1x1x4xf32>
    %cst_3 = arith.constant dense<0.000000e+00> : vector<1xf32>
    %10 = vector.multi_reduction <add>, %9, %cst_3 [1, 2] : vector<1x1x4xf32> to vector<1xf32>
    %11 = vector.shape_cast %10 : vector<1xf32> to vector<1x1x1xf32>
    %12 = vector.extract %11[0, 0, 0] : f32 from vector<1x1x1xf32>
    %c0_4 = arith.constant 0 : index
    %c0_5 = arith.constant 0 : index
    %13 = memref.load %arg2[%c0_4, %c0_5] : memref<1x1xf32, #tpu.memory_space<smem>>
    memref.store %12, %arg2[%c0_4, %c0_5] : memref<1x1xf32, #tpu.memory_space<smem>>
    return
  }
}

</mosaic_0001>

<llo_original>
// kernel: tpu_custom_call.1
$region0: #{tpu_custom_call.1}
  #allocation0 [shape = 'u32[]', space=smem, size = 0x4, offset = 0x4, fixed_abs, tag = 'smem constant byte address 0x4 - core index']
  #allocation1 [shape = 'u32[144,128]{1,0:T(1,128)}', space=vmem, size = 0x12000, scoped, tag = 'internal scratch']
  %s0 = inlined_call_operand.hbm [shape: f32[1,4], index: 0, kind: input, shape index: {}]
  %s1 = inlined_call_operand.vmem [shape: f32[1,4], index: 1, kind: input, shape index: {}]
  %s2 = inlined_call_operand.hbm [shape: f32[1,1], index: 2, kind: output, shape index: {}]
  %s3 = sld [smem:[#allocation0]]
  $region22: #{tpu_custom_call.1} parent=0
    _
  %s5 = ssub.s32 1, %s3
  %s6 = scalar_select 0, %s5, %s3
  $region1: #{tpu_custom_call.1} parent=0
    #allocation2 [shape = 'u8[512]{0}', space=vmem, size = 0x400, scoped, tag = 'input window, operand 0, single buffered']
    #allocation3 [shape = 's32[1]{0}', space=sflag, size = 0x4, scoped, tag = 'scoped memory for tpu_custom_call.1']
    #allocation4 [shape = 's32[1]{0}', space=sflag, size = 0x4, scoped, tag = 'scoped memory for tpu_custom_call.1']
    #allocation5 [shape = 'u8[512]{0}', space=smem, size = 0x200, scoped, tag = 'output window, operand 0, single buffered']
    %7 = vsyncpa [#allocation3], 0
    %8 = vsyncpa [#allocation4], 0
    // Predicated region
    $region2: #{tpu_custom_call.1} parent=1 // pred_check
      _
    $region3: #{tpu_custom_call.1} parent=1 // pred_check_branch
      %10 = sbr.rel (0) target = $region5
    $region4: #{tpu_custom_call.1} parent=1 // pred_region
      %s12 = ssub.s32 16, 16
      %13 = vsyncadd [#allocation3], %s12
      %s15 = sshll.u32 [#allocation2], 4
      %s16 = int_to_ptr.vmem [resolvable:$true] %s15
      %18 = dma.hbm_to_vmem [thread:$0]  %s0, 16, %s16, [#allocation3]
    $region5: #{tpu_custom_call.1} parent=1 // pred_fallthru
      _
    // Predicated region
    $region6: #{tpu_custom_call.1} parent=1 // pred_check
      _
    $region7: #{tpu_custom_call.1} parent=1 // pred_check_branch
      %20 = sbr.rel (0) target = $region9
    $region8: #{tpu_custom_call.1} parent=1 // pred_region
      _
    $region9: #{tpu_custom_call.1} parent=1 // pred_fallthru
      _
    // Predicated region
    $region10: #{tpu_custom_call.1} parent=1 // pred_check
      _
    $region11: #{tpu_custom_call.1} parent=1 // pred_check_branch
      %22 = sbr.rel (0) target = $region13
    $region12: #{tpu_custom_call.1} parent=1 // pred_region
      %23 = dma.done [#allocation3], 16
    $region13: #{tpu_custom_call.1} parent=1 // pred_fallthru
      _
    %v24 = vld [vmem:[#allocation2] sm:$0x1]
    %v25 = vld [vmem:[%s1] sm:$0x1]
    %v26 = vmul.f32 %v25, %v25
    %v27 = vmul.f32 %v26, 2.0
    %v28 = vrcp.pop %v27
    %v29 = vmul.f32 %v24, %v28
    %v30 = vlog2.pop %v26
    %v31 = vmul.f32 %v30, 0.6931472
    %v32 = vadd.f32 %v29, %v31
    %vm33 = vcmask 24576
    %v34 = vsel %vm33, %v32, 0.0
    %35 = vadd.xlane.f32.xlu0 %v34
    %v36 = vpop.xlane.xlu0 %35
    %v37 = vrot.slane %v36, 4
    %v38 = vadd.f32 %v36, %v37
    %v39 = vrot.slane %v38, 2
    %v40 = vadd.f32 %v38, %v39
    %v41 = vrot.slane %v40, 1
    %v42 = vadd.f32 %v40, %v41
    %s43 = vtos %v42
    %s44 = scalar_lea.smem [#allocation5], 0
    %45 = sst [smem:[%s44]] %s43
    // Predicated region
    $region14: #{tpu_custom_call.1} parent=1 // pred_check
      _
    $region15: #{tpu_custom_call.1} parent=1 // pred_check_branch
      %47 = sbr.rel (0) target = $region17
    $region16: #{tpu_custom_call.1} parent=1 // pred_region
      %s49 = ssub.s32 16, 16
      %50 = vsyncadd [#allocation4], %s49
      %53 = dma.smem_to_hbm [#allocation5], 16, %s2, [#allocation4]
    $region17: #{tpu_custom_call.1} parent=1 // pred_fallthru
      _
    // Predicated region
    $region18: #{tpu_custom_call.1} parent=1 // pred_check
      _
    $region19: #{tpu_custom_call.1} parent=1 // pred_check_branch
      %55 = sbr.rel (0) target = $region21
    $region20: #{tpu_custom_call.1} parent=1 // pred_region
      %56 = dma.done [#allocation4], 16
    $region21: #{tpu_custom_call.1} parent=1 // pred_fallthru
      _
    %57 = sfence
    %58 = vsyncpa [#allocation3], 1
    %59 = vsyncpa [#allocation4], 1

</llo_original>
